<compile_context>
chip_gen: v7x
topology: tpu7x:2x2x1
jax: 0.10.0
libtpu: 0.0.40
codegen_flags: <defaults>
</compile_context>

<pallas_src>
import jax
import jax.numpy as jnp
from jax.experimental import pallas as pl
from jax.experimental.pallas import tpu as pltpu

_SHIFT = (-0.030, -0.088, -0.188)
_SCALE = (0.458, 0.448, 0.450)

_TARGET_TILE_BYTES = 2 * 1024 * 1024   # ~2 MiB per input tile
_PALLAS_MIN_BYTES = 1 * 1024 * 1024    # below this, plain JAX is faster


def _scaling_kernel(shift_ref, inv_scale_ref, x_ref, o_ref):
    # shift_ref / inv_scale_ref: SMEM (C,) float32
    # x_ref / o_ref:             VMEM (1, 1, R, LANE) in x.dtype
    c = pl.program_id(1)
    shift = shift_ref[c]
    inv_scale = inv_scale_ref[c]
    x = x_ref[...].astype(jnp.float32)
    o_ref[...] = ((x - shift) * inv_scale).astype(o_ref.dtype)


def _pick_lane(p: int) -> int:
    """Largest lane width in {1024, 512, 256, 128} dividing p exactly;
    128 otherwise (the caller then pads p up to a multiple of 128)."""
    for lane in (1024, 512, 256, 128):
        if p % lane == 0:
            return lane
    return 128


@jax.jit
def _scaling_layer_pallas(x: jax.Array) -> jax.Array:
    N, C, H, W = x.shape
    assert C == 3, "ScalingLayer is defined for 3 input channels (RGB)."

    shift = jnp.asarray(_SHIFT, dtype=jnp.float32)
    inv_scale = 1.0 / jnp.asarray(_SCALE, dtype=jnp.float32)

    p = H * W
    lane = _pick_lane(p)
    p_padded = pl.cdiv(p, lane) * lane          # != p only when H*W % 128 != 0
    rows = p_padded // lane

    xr = x.reshape(N, C, p)
    if p_padded != p:
        xr = jnp.pad(xr, ((0, 0), (0, 0), (0, p_padded - p)))
    xr = xr.reshape(N, C, rows, lane)

    itemsize = jnp.dtype(x.dtype).itemsize
    target_rows = max(8, (_TARGET_TILE_BYTES // (lane * itemsize)) // 8 * 8)
    if rows <= target_rows:
        # Single spatial tile per (n, c) plane; the block dim equals the full
        # array dim, so no divisibility-by-8 requirement on it.
        block_rows = rows
    else:
        block_rows = target_rows                # multiple of 8
    s_tiles = pl.cdiv(rows, block_rows)         # last tile may be partial

    out = pl.pallas_call(
        _scaling_kernel,
        out_shape=jax.ShapeDtypeStruct((N, C, rows, lane), x.dtype),
        grid=(N, C, s_tiles),
        in_specs=[
            pl.BlockSpec(memory_space=pltpu.SMEM),     # shift (C,)
            pl.BlockSpec(memory_space=pltpu.SMEM),     # 1/scale (C,)
            pl.BlockSpec((1, 1, block_rows, lane), lambda n, c, s: (n, c, s, 0)),
        ],
        out_specs=pl.BlockSpec((1, 1, block_rows, lane),
                               lambda n, c, s: (n, c, s, 0)),
        compiler_params=pltpu.CompilerParams(
            dimension_semantics=("parallel", "parallel", "parallel")
        ),
    )(shift, inv_scale, xr)

    out = out.reshape(N, C, p_padded)
    if p_padded != p:
        out = out[:, :, :p]
    return out.reshape(N, C, H, W)


@jax.jit
def scaling_layer(x: jax.Array) -> jax.Array:
    """(x - shift) / scale with per-channel shift/scale, NCHW input."""
    N, C, H, W = x.shape
    assert C == 3, "ScalingLayer is defined for 3 input channels (RGB)."
    nbytes = x.size * jnp.dtype(x.dtype).itemsize
    if nbytes < _PALLAS_MIN_BYTES:
        # Tiny tensors: pallas_call launch + per-step overhead dwarfs the work.
        shift = jnp.asarray(_SHIFT, jnp.float32).reshape(1, 3, 1, 1)
        scale = jnp.asarray(_SCALE, jnp.float32).reshape(1, 3, 1, 1)
        return ((x.astype(jnp.float32) - shift) / scale).astype(x.dtype)
    return _scaling_layer_pallas(x)


if __name__ == "__main__":
    key = jax.random.PRNGKey(0)

    def ref_fn(x):
        shift = jnp.asarray(_SHIFT, jnp.float32).reshape(1, 3, 1, 1)
        scale = jnp.asarray(_SCALE, jnp.float32).reshape(1, 3, 1, 1)
        return ((x.astype(jnp.float32) - shift) / scale).astype(x.dtype)

    # 1) Small, 128-aligned plane (16*16 = 256): exercise the Pallas path
    #    directly (the public wrapper takes the tiny-input JAX fallback here).
    x_small = jax.random.normal(key, (2, 3, 16, 16), dtype=jnp.float32)
    out = jax.block_until_ready(_scaling_layer_pallas(x_small))
    assert out.shape == x_small.shape and out.dtype == x_small.dtype
    assert jnp.allclose(out, ref_fn(x_small), atol=1e-5, rtol=1e-5)
    out_w = jax.block_until_ready(scaling_layer(x_small))
    assert jnp.allclose(out_w, ref_fn(x_small), atol=1e-5, rtol=1e-5)

    # 2) Misaligned plane (20*20 = 400, not a multiple of 128): padding path.
    x_pad = jax.random.normal(jax.random.PRNGKey(1), (2, 3, 20, 20),
                              dtype=jnp.float32)
    out_pad = jax.block_until_ready(_scaling_layer_pallas(x_pad))
    assert jnp.allclose(out_pad, ref_fn(x_pad), atol=1e-5, rtol=1e-5)

    # 3) bf16 input: f32 compute, bf16 store.
    x_bf16 = x_small.astype(jnp.bfloat16)
    out_bf16 = jax.block_until_ready(_scaling_layer_pallas(x_bf16))
    assert out_bf16.dtype == jnp.bfloat16
    assert jnp.allclose(out_bf16.astype(jnp.float32),
                        ref_fn(x_bf16).astype(jnp.float32),
                        atol=5e-2, rtol=2e-2)

    # 4) Larger tensor (~12 MiB): wrapper dispatches to Pallas with multiple
    #    ~2 MiB spatial tiles per channel plane (grid = (1, 3, 2)).
    x_big = jax.random.normal(jax.random.PRNGKey(2), (1, 3, 1024, 1024),
                              dtype=jnp.float32)
    out_big = jax.block_until_ready(scaling_layer(x_big))
    assert jnp.allclose(out_big, ref_fn(x_big), atol=1e-5, rtol=1e-5)

    print("KERNEL_OK")
</pallas_src>

<mosaic_0001>
module attributes {stable_mosaic.version = 11 : i64} {
  func.func @_scaling_kernel(%arg0: i32, %arg1: i32, %arg2: i32, %arg3: memref<3xf32, #tpu.memory_space<smem>>, %arg4: memref<3xf32, #tpu.memory_space<smem>>, %arg5: memref<1x1x1x256xf32, #tpu.memory_space<vmem>>, %arg6: memref<1x1x1x256xf32, #tpu.memory_space<vmem>>) attributes {dimension_semantics = [#tpu.dimension_semantics<parallel>, #tpu.dimension_semantics<parallel>, #tpu.dimension_semantics<parallel>], iteration_bounds = array<i64: 2, 3, 1>, scalar_prefetch = 0 : i64, scratch_operands = 0 : i64, tpu.core_type = #tpu.core_type<tc>, window_params = [{transform_indices = @transform_0, window_bounds = array<i64: 3>}, {transform_indices = @transform_1, window_bounds = array<i64: 3>}, {transform_indices = @transform_2, window_bounds = array<i64: 1, 1, 1, 256>}, {transform_indices = @transform_3, window_bounds = array<i64: 1, 1, 1, 256>}]} {
    %0 = arith.index_cast %arg1 : i32 to index
    %1 = memref.load %arg3[%0] : memref<3xf32, #tpu.memory_space<smem>>
    %2 = arith.index_cast %arg1 : i32 to index
    %3 = memref.load %arg4[%2] : memref<3xf32, #tpu.memory_space<smem>>
    %c0 = arith.constant 0 : index
    %c0_0 = arith.constant 0 : index
    %c0_1 = arith.constant 0 : index
    %c0_2 = arith.constant 0 : index
    %4 = vector.load %arg5[%c0, %c0_0, %c0_1, %c0_2] : memref<1x1x1x256xf32, #tpu.memory_space<vmem>>, vector<1x1x1x256xf32>
    %5 = vector.broadcast %1 : f32 to vector<1x1x1x256xf32>
    %6 = arith.subf %4, %5 : vector<1x1x1x256xf32>
    %7 = vector.broadcast %3 : f32 to vector<1x1x1x256xf32>
    %8 = arith.mulf %6, %7 : vector<1x1x1x256xf32>
    %c0_3 = arith.constant 0 : index
    %c0_4 = arith.constant 0 : index
    %c0_5 = arith.constant 0 : index
    %c0_6 = arith.constant 0 : index
    %9 = vector.load %arg6[%c0_3, %c0_4, %c0_5, %c0_6] : memref<1x1x1x256xf32, #tpu.memory_space<vmem>>, vector<1x1x1x256xf32>
    tpu.vector_store %arg6[%c0_3, %c0_4, %c0_5, %c0_6], %8 {strides = array<i32>} : memref<1x1x1x256xf32, #tpu.memory_space<vmem>>, vector<1x1x1x256xf32>,
    return
  }
  func.func @transform_0(%arg0: i32, %arg1: i32, %arg2: i32) -> i32 {
    %c0_i32 = arith.constant 0 : i32
    %c0_i32_0 = arith.constant 0 : i32
    return %c0_i32 : i32
  }
  func.func @transform_1(%arg0: i32, %arg1: i32, %arg2: i32) -> i32 {
    %c0_i32 = arith.constant 0 : i32
    %c0_i32_0 = arith.constant 0 : i32
    return %c0_i32 : i32
  }
  func.func @transform_2(%arg0: i32, %arg1: i32, %arg2: i32) -> (i32, i32, i32, i32) {
    %c0_i32 = arith.constant 0 : i32
    %c0_i32_0 = arith.constant 0 : i32
    return %arg0, %arg1, %arg2, %c0_i32 : i32, i32, i32, i32
  }
  func.func @transform_3(%arg0: i32, %arg1: i32, %arg2: i32) -> (i32, i32, i32, i32) {
    %c0_i32 = arith.constant 0 : i32
    %c0_i32_0 = arith.constant 0 : i32
    return %arg0, %arg1, %arg2, %c0_i32 : i32, i32, i32, i32
  }
}

</mosaic_0001>

<llo_original>
// kernel: _scaling_layer_pallas.1
$region0: #{_scaling_layer_pallas.1}
  #allocation0 [shape = 'u32[]', space=smem, size = 0x4, offset = 0x4, fixed_abs, tag = 'smem constant byte address 0x4 - core index']
  #allocation1 [shape = 'u32[144,128]{1,0:T(1,128)}', space=vmem, size = 0x12000, scoped, tag = 'internal scratch']
  %s0 = inlined_call_operand.vmem [shape: f32[3], index: 0, kind: input, shape index: {}]
  %s1 = inlined_call_operand.vmem [shape: f32[3], index: 1, kind: input, shape index: {}]
  %s2 = inlined_call_operand.vmem [shape: f32[2,3,1,256], index: 2, kind: input, shape index: {}]
  %s3 = inlined_call_operand.vmem [shape: f32[2,3,1,256], index: 3, kind: output, shape index: {}]
  %s4 = sld [smem:[#allocation0]]
  $region53: #{_scaling_layer_pallas.1} parent=0
    _
  %s6 = ssub.s32 1, %s4
  %s7 = scalar_select 0, %s6, %s4
  $region1: #{_scaling_layer_pallas.1} parent=0
    #allocation2 [shape = 'u8[512]{0}', space=smem, size = 0x200, scoped, tag = 'input window, operand 0, single buffered']
    #allocation3 [shape = 's32[2]{0}', space=sflag, size = 0x8, scoped, tag = 'scoped memory for _scaling_layer_pallas.1']
    #allocation4 [shape = 'u8[512]{0}', space=smem, size = 0x200, scoped, tag = 'input window, operand 1, single buffered']
    #allocation5 [shape = 's32[1]{0}', space=sflag, size = 0x4, scoped, tag = 'scoped memory for _scaling_layer_pallas.1']
    %8 = vsyncpa [#allocation3], 0
    %9 = vsyncpa [#allocation5], 0
    loop: start=0, step=1, limit=8
    $region2: #{_scaling_layer_pallas.1} parent=1 // loop_pre_header
      _
    $region3: #{_scaling_layer_pallas.1} parent=1 // loop_header
      %s11 = sphi 0, %s15
      %p12 = scmp.ge.s32.totalorder %s11, 8
      %s18 = sphi 0, %s37
      %s19 = sphi 0, %s33
      %s20 = sphi 0, %s29
      %s21 = sphi 0, %s18
      %s22 = sphi 0, %s19
      %s23 = sphi 0, %s20
      %s24 = sphi 0, %s21
      %s25 = sphi 0, %s22
      %s26 = sphi 0, %s23
      %s38 = sphi 0, %s38
      %s40 = sphi 0, %s38
      %s41 = sphi 0, %s40
      %s55 = sphi 0, %s41
      %s59 = sphi 0, %s59
      %s61 = sphi 0, %s59
      %s62 = sphi 0, %s61
      %s76 = sphi 0, %s62
      %s86 = sphi 0, %s88
      %s89 = sphi 0, %s86
      %s90 = sphi 0, %s89
      %s106 = sphi 0, %s90
      %s116 = sphi 0, %s118
      %s119 = sphi 0, %s116
      %s120 = sphi 0, %s119
      %s136 = sphi 0, %s120
    $region4: #{_scaling_layer_pallas.1} parent=1 // loop_header_branch
      %14 = sbr.rel (%p12) target = $region8
    $region5: #{_scaling_layer_pallas.1} parent=1 // loop_body
      %s16 = ssub.s32 %s11, 1
      %s17 = ssub.s32 %s11, 2
      %s27 = sadd.s32 1, %s20
      %p28 = scmp.ge.s32.totalorder %s27, 1
      %s29 = scalar_select %p28, 0, %s27
      %s30 = sadd.s32 1, %s19
      %s31 = scalar_select %p28, %s30, %s19
      %p32 = scmp.ge.s32.totalorder %s31, 3
      %s33 = scalar_select %p32, 0, %s31
      %s34 = sadd.s32 1, %s18
      %s35 = scalar_select %p32, %s34, %s18
      %p36 = scmp.ge.s32.totalorder %s35, 2
      %s37 = scalar_select %p36, 0, %s35
      %s39 = sadd.s32 %s38, 1
      %p42 = scmp.eq.s32.totalorder %s11, 5
      %p43 = scmp.ne.s32.totalorder %s38, %s40
      %p44 = scmp.eq.s32.totalorder %s11, 0
      %p45 = por %p43, %p44
      %p46 = scmp.ne.s32.totalorder %s38, %s40
      %p47 = scmp.eq.s32.totalorder %s16, 5
      %p48 = por %p46, %p47
      %p49 = scmp.ne.s32.totalorder %s40, %s41
      %p50 = scmp.eq.s32.totalorder %s16, 0
      %p51 = por %p49, %p50
      %p52 = scmp.ne.s32.totalorder %s40, %s41
      %p53 = scmp.eq.s32.totalorder %s17, 5
      %p54 = por %p52, %p53
      %p56 = scmp.ne.s32.totalorder %s41, %s55
      %p57 = scmp.eq.s32.totalorder %s17, 0
      %p58 = por %p56, %p57
      %s60 = sadd.s32 %s59, 1
      %p63 = scmp.eq.s32.totalorder %s11, 5
      %p64 = scmp.ne.s32.totalorder %s59, %s61
      %p65 = scmp.eq.s32.totalorder %s11, 0
      %p66 = por %p64, %p65
      %p67 = scmp.ne.s32.totalorder %s59, %s61
      %p68 = scmp.eq.s32.totalorder %s16, 5
      %p69 = por %p67, %p68
      %p70 = scmp.ne.s32.totalorder %s61, %s62
      %p71 = scmp.eq.s32.totalorder %s16, 0
      %p72 = por %p70, %p71
      %p73 = scmp.ne.s32.totalorder %s61, %s62
      %p74 = scmp.eq.s32.totalorder %s17, 5
      %p75 = por %p73, %p74
      %p77 = scmp.ne.s32.totalorder %s62, %s76
      %p78 = scmp.eq.s32.totalorder %s17, 0
      %p79 = por %p77, %p78
      %s80 = ssub.s32 %s18, %s37
      %s81 = ssub.s32 %s19, %s33
      %s82 = sor.u32 %s80, %s81
      %s83 = ssub.s32 %s20, %s29
      %s84 = sor.u32 %s82, %s83
      %p85 = scmp.eq.s32.totalorder %s84, 0
      %s87 = sadd.s32 %s86, 1
      %s88 = scalar_select %p85, %s86, %s87
      %p91 = pneg %p85
      %p92 = scmp.eq.s32.totalorder %s11, 5
      %p93 = por %p91, %p92
      %p94 = scmp.ne.s32.totalorder %s86, %s89
      %p95 = scmp.eq.s32.totalorder %s11, 0
      %p96 = por %p94, %p95
      %p97 = scmp.ne.s32.totalorder %s86, %s89
      %p98 = scmp.eq.s32.totalorder %s16, 5
      %p99 = por %p97, %p98
      %p100 = scmp.ne.s32.totalorder %s89, %s90
      %p101 = scmp.eq.s32.totalorder %s16, 0
      %p102 = por %p100, %p101
      %p103 = scmp.ne.s32.totalorder %s89, %s90
      %p104 = scmp.eq.s32.totalorder %s17, 5
      %p105 = por %p103, %p104
      %p107 = scmp.ne.s32.totalorder %s90, %s106
      %p108 = scmp.eq.s32.totalorder %s17, 0
      %p109 = por %p107, %p108
      %s110 = ssub.s32 %s18, %s37
      %s111 = ssub.s32 %s19, %s33
      %s112 = sor.u32 %s110, %s111
      %s113 = ssub.s32 %s20, %s29
      %s114 = sor.u32 %s112, %s113
      %p115 = scmp.eq.s32.totalorder %s114, 0
      %s117 = sadd.s32 %s116, 1
      %s118 = scalar_select %p115, %s116, %s117
      %p121 = pneg %p115
      %p122 = scmp.eq.s32.totalorder %s11, 5
      %p123 = por %p121, %p122
      %p124 = scmp.ne.s32.totalorder %s116, %s119
      %p125 = scmp.eq.s32.totalorder %s11, 0
      %p126 = por %p124, %p125
      %p127 = scmp.ne.s32.totalorder %s116, %s119
      %p128 = scmp.eq.s32.totalorder %s16, 5
      %p129 = por %p127, %p128
      %p130 = scmp.ne.s32.totalorder %s119, %s120
      %p131 = scmp.eq.s32.totalorder %s16, 0
      %p132 = por %p130, %p131
      %p133 = scmp.ne.s32.totalorder %s119, %s120
      %p134 = scmp.eq.s32.totalorder %s17, 5
      %p135 = por %p133, %p134
      %p137 = scmp.ne.s32.totalorder %s120, %s136
      %p138 = scmp.eq.s32.totalorder %s17, 0
      %p139 = por %p137, %p138
      %p140 = scmp.le.s32.totalorder 1, %s11
      %p141 = scmp.lt.s32.totalorder %s11, 7
      %p142 = pnand %p140, %p141
      %p143 = pneg %p142
      // Predicated region
      $region9: #{_scaling_layer_pallas.1} parent=5 // pred_check
        _
      $region10: #{_scaling_layer_pallas.1} parent=5 // pred_check_branch
        %145 = sbr.rel (%p142) target = $region12
      $region11: #{_scaling_layer_pallas.1} parent=5 // pred_region
        %s146 = ssub.s32 %s11, 1
        // Predicated region
        $region13: #{_scaling_layer_pallas.1} parent=11 // pred_check
          %p147 = pneg %p51
        $region14: #{_scaling_layer_pallas.1} parent=11 // pred_check_branch
          %149 = sbr.rel (%p147) target = $region16
        $region15: #{_scaling_layer_pallas.1} parent=11 // pred_region
          %s151 = ssub.s32 16, 16
          %152 = vsyncadd [#allocation3], %s151
          %s154 = sshll.u32 %s0, 4
          %s155 = int_to_ptr.vmem [resolvable:$true] %s154
          %157 = dma.vmem_to_smem %s155, 16, [#allocation2], [#allocation3]
        $region16: #{_scaling_layer_pallas.1} parent=11 // pred_fallthru
          _
        // Predicated region
        $region17: #{_scaling_layer_pallas.1} parent=11 // pred_check
          %p158 = pneg %p72
        $region18: #{_scaling_layer_pallas.1} parent=11 // pred_check_branch
          %160 = sbr.rel (%p158) target = $region20
        $region19: #{_scaling_layer_pallas.1} parent=11 // pred_region
          %s162 = ssub.s32 16, 16
          %163 = vsyncadd [#allocation5], %s162
          %s165 = sshll.u32 %s1, 4
          %s166 = int_to_ptr.vmem [resolvable:$true] %s165
          %168 = dma.vmem_to_smem %s166, 16, [#allocation4], [#allocation5]
        $region20: #{_scaling_layer_pallas.1} parent=11 // pred_fallthru
          _
      $region12: #{_scaling_layer_pallas.1} parent=5 // pred_fallthru
        _
      %p169 = scmp.lt.s32.totalorder %s11, 6
      // Predicated region
      $region21: #{_scaling_layer_pallas.1} parent=5 // pred_check
        %p170 = pneg %p169
      $region22: #{_scaling_layer_pallas.1} parent=5 // pred_check_branch
        %172 = sbr.rel (%p170) target = $region24
      $region23: #{_scaling_layer_pallas.1} parent=5 // pred_region
        // Predicated region
        $region25: #{_scaling_layer_pallas.1} parent=23 // pred_check
          %p173 = pneg %p96
        $region26: #{_scaling_layer_pallas.1} parent=23 // pred_check_branch
          %175 = sbr.rel (%p173) target = $region28
        $region27: #{_scaling_layer_pallas.1} parent=23 // pred_region
          %p176 = scmp.lt.s32.totalorder %s18, 1
          %s177 = scalar_select %p176, %s18, 1
          %p178 = scmp.lt.s32.totalorder %s19, 2
          %s179 = scalar_select %p178, %s19, 2
          %p180 = scmp.lt.s32.totalorder %s20, 0
          %s181 = scalar_select %p180, %s20, 0
          %s182 = smul.addr %s181, 2
          %s183 = smul.addr %s179, 2
          %s184 = sadd.s32 %s182, %s183
          %s185 = smul.addr %s177, 6
          %s186 = sadd.s32 %s184, %s185
          %s187 = scalar_lea.vmem %s2, %s186
        $region28: #{_scaling_layer_pallas.1} parent=23 // pred_fallthru
          _
      $region24: #{_scaling_layer_pallas.1} parent=5 // pred_fallthru
        _
      %p188 = scmp.le.s32.totalorder 1, %s11
      %p189 = scmp.lt.s32.totalorder %s11, 7
      %p190 = pnand %p188, %p189
      %p191 = pneg %p190
      // Predicated region
      $region29: #{_scaling_layer_pallas.1} parent=5 // pred_check
        _
      $region30: #{_scaling_layer_pallas.1} parent=5 // pred_check_branch
        %193 = sbr.rel (%p190) target = $region32
      $region31: #{_scaling_layer_pallas.1} parent=5 // pred_region
        %s194 = ssub.s32 %s11, 1
        // Predicated region
        $region33: #{_scaling_layer_pallas.1} parent=31 // pred_check
          %p195 = pneg %p51
        $region34: #{_scaling_layer_pallas.1} parent=31 // pred_check_branch
          %197 = sbr.rel (%p195) target = $region36
        $region35: #{_scaling_layer_pallas.1} parent=31 // pred_region
          %198 = dma.done [#allocation3], 16
        $region36: #{_scaling_layer_pallas.1} parent=31 // pred_fallthru
          _
        // Predicated region
        $region37: #{_scaling_layer_pallas.1} parent=31 // pred_check
          %p199 = pneg %p72
        $region38: #{_scaling_layer_pallas.1} parent=31 // pred_check_branch
          %201 = sbr.rel (%p199) target = $region40
        $region39: #{_scaling_layer_pallas.1} parent=31 // pred_region
          %202 = dma.done [#allocation5], 16
        $region40: #{_scaling_layer_pallas.1} parent=31 // pred_fallthru
          _
        %203 = sfence
        %p204 = pneg %p51
        %p205 = pneg %p48
        %p206 = pneg %p72
        %p207 = pneg %p69
        %p208 = scmp.lt.s32.totalorder %s21, 1
        %s209 = scalar_select %p208, %s21, 1
        %p210 = scmp.lt.s32.totalorder %s22, 2
        %s211 = scalar_select %p210, %s22, 2
        %p212 = scmp.lt.s32.totalorder %s23, 0
        %s213 = scalar_select %p212, %s23, 0
        %s214 = smul.addr %s213, 2
        %s215 = smul.addr %s211, 2
        %s216 = sadd.s32 %s214, %s215
        %s217 = smul.addr %s209, 6
        %s218 = sadd.s32 %s216, %s217
        %s219 = scalar_lea.vmem %s2, %s218
        %p220 = pneg %p102
        %p221 = pneg %p99
        %p222 = pneg %p132
        %p223 = pneg %p129
        %p224 = scmp.lt.s32.totalorder %s21, 1
        %s225 = scalar_select %p224, %s21, 1
        %p226 = scmp.lt.s32.totalorder %s22, 2
        %s227 = scalar_select %p226, %s22, 2
        %p228 = scmp.lt.s32.totalorder %s23, 0
        %s229 = scalar_select %p228, %s23, 0
        %s230 = smul.addr %s229, 2
        %s231 = smul.addr %s227, 2
        %s232 = sadd.s32 %s230, %s231
        %s233 = smul.addr %s225, 6
        %s234 = sadd.s32 %s232, %s233
        %s235 = scalar_lea.vmem %s3, %s234
        %p236 = scmp.lt.s32.totalorder %s21, 1
        %s237 = scalar_select %p236, %s21, 1
        %p238 = scmp.lt.s32.totalorder %s22, 2
        %s239 = scalar_select %p238, %s22, 2
        %p240 = scmp.lt.s32.totalorder %s23, 0
        %s241 = scalar_select %p240, %s23, 0
        %s242 = smul.addr %s241, 2
        %s243 = smul.addr %s239, 2
        %s244 = sadd.s32 %s242, %s243
        %s245 = smul.addr %s237, 6
        %s246 = sadd.s32 %s244, %s245
        %s247 = scalar_lea.vmem %s2, %s246
        %p248 = scmp.lt.s32.totalorder %s21, 1
        %s249 = scalar_select %p248, %s21, 1
        %p250 = scmp.lt.s32.totalorder %s22, 2
        %s251 = scalar_select %p250, %s22, 2
        %p252 = scmp.lt.s32.totalorder %s23, 0
        %s253 = scalar_select %p252, %s23, 0
        %s254 = smul.addr %s253, 2
        %s255 = smul.addr %s251, 2
        %s256 = sadd.s32 %s254, %s255
        %s257 = smul.addr %s249, 6
        %s258 = sadd.s32 %s256, %s257
        %s259 = scalar_lea.vmem %s3, %s258
        %s260 = sld [smem:[#allocation2 + %s22]]
        %s261 = sld [smem:[#allocation4 + %s22]]
        %v262 = vld [vmem:[%s247] sm:$0x3]
        %v263 = vstv %s260
        %v264 = vsub.f32 %v262, %v263
        %v265 = vstv %s261
        %v266 = vmul.f32 %v264, %v265
        %v267 = vlaneseq
        %vm268 = vcmp.ge.s32.totalorder %v267, 0
        %vm269 = vcmp.lt.s32.totalorder %v267, 256
        %vm270 = vmand %vm268, %vm269
        %271 = vst.msk [vmem:[%s259] sm:$0x3] %vm270, %v266
        %p272 = scmp.lt.s32.totalorder %s21, 1
        %s273 = scalar_select %p272, %s21, 1
        %p274 = scmp.lt.s32.totalorder %s22, 2
        %s275 = scalar_select %p274, %s22, 2
        %p276 = scmp.lt.s32.totalorder %s23, 0
        %s277 = scalar_select %p276, %s23, 0
        %s278 = smul.addr %s277, 2
        %s279 = smul.addr %s275, 2
        %s280 = sadd.s32 %s278, %s279
        %s281 = smul.addr %s273, 6
        %s282 = sadd.s32 %s280, %s281
        %s283 = scalar_lea.vmem %s3, %s282
        // Predicated region
        $region41: #{_scaling_layer_pallas.1} parent=31 // pred_check
          %p284 = pneg %p129
        $region42: #{_scaling_layer_pallas.1} parent=31 // pred_check_branch
          %286 = sbr.rel (%p284) target = $region44
        $region43: #{_scaling_layer_pallas.1} parent=31 // pred_region
          _
        $region44: #{_scaling_layer_pallas.1} parent=31 // pred_fallthru
          _
      $region32: #{_scaling_layer_pallas.1} parent=5 // pred_fallthru
        _
      %p287 = scmp.le.s32.totalorder 2, %s11
      // Predicated region
      $region45: #{_scaling_layer_pallas.1} parent=5 // pred_check
        %p288 = pneg %p287
      $region46: #{_scaling_layer_pallas.1} parent=5 // pred_check_branch
        %290 = sbr.rel (%p288) target = $region48
      $region47: #{_scaling_layer_pallas.1} parent=5 // pred_region
        %s291 = ssub.s32 %s11, 2
        // Predicated region
        $region49: #{_scaling_layer_pallas.1} parent=47 // pred_check
          %p292 = pneg %p135
        $region50: #{_scaling_layer_pallas.1} parent=47 // pred_check_branch
          %294 = sbr.rel (%p292) target = $region52
        $region51: #{_scaling_layer_pallas.1} parent=47 // pred_region
          %p295 = scmp.lt.s32.totalorder %s24, 1
          %s296 = scalar_select %p295, %s24, 1
          %p297 = scmp.lt.s32.totalorder %s25, 2
          %s298 = scalar_select %p297, %s25, 2
          %p299 = scmp.lt.s32.totalorder %s26, 0
          %s300 = scalar_select %p299, %s26, 0
          %s301 = smul.addr %s300, 2
          %s302 = smul.addr %s298, 2
          %s303 = sadd.s32 %s301, %s302
          %s304 = smul.addr %s296, 6
          %s305 = sadd.s32 %s303, %s304
          %s306 = scalar_lea.vmem %s3, %s305
        $region52: #{_scaling_layer_pallas.1} parent=47 // pred_fallthru
          _
      $region48: #{_scaling_layer_pallas.1} parent=5 // pred_fallthru
        _
    $region6: #{_scaling_layer_pallas.1} parent=1 // loop_footer
      %s15 = sadd.s32 1, %s11
    $region7: #{_scaling_layer_pallas.1} parent=1 // loop_footer_branch
      %10 = sbr.rel target = $region3
    $region8: #{_scaling_layer_pallas.1} parent=1 // loop_exit
      _
    %307 = vsyncpa [#allocation3], 1
    %s308 = scalar_lea.sflag [#allocation3], 1
    %309 = vsyncpa %s308, 1
    %310 = vsyncpa [#allocation5], 1

</llo_original>
